<compile_context>
chip_gen: v7x
topology: tpu7x:2x2x1
jax: 0.10.0
libtpu: 0.0.40
codegen_flags: <defaults>
</compile_context>

<pallas_src>
import numpy as np

import jax
import jax.numpy as jnp
from jax.experimental import pallas as pl
from jax.experimental.pallas import tpu as pltpu  # noqa: F401  (TPU backend)


# ----------------------------------------------------------------------------
# Fused Pallas kernel: fc1 + sigmoid + conv3x3 + sigmoid + maxpool + fc2
# ----------------------------------------------------------------------------
def _sigmoid(v):
    # exp runs on the EUP; exact reciprocal keeps parity with torch.nn.Sigmoid.
    return 1.0 / (1.0 + jnp.exp(-v))


def _vfc_kernel(xa_ref, w1b_ref, mcat_ref, bconv_ref, w2_ref, b2_ref, o_ref):
    # fc1 (+bias via homogeneous coord) + sigmoid:
    # (1, 8) @ (8, 64) -> (1, 64)   (== view(1, 8, 8) row-major)
    h = _sigmoid(jnp.dot(xa_ref[...], w1b_ref[...],
                         preferred_element_type=jnp.float32))

    # conv3x3(pad=1) pre-activations for all 4 pooling corners in one matmul:
    # (1, 64) @ (64, 512) -> (1, 512); lane layout per 128-wide corner segment
    # is c*16 + i2*4 + j2 (torch flatten order of the pooled map).
    z = jnp.dot(h, mcat_ref[...], preferred_element_type=jnp.float32)

    # 2x2 max over the four lane-aligned corner segments, then bias + sigmoid.
    # (selection & max commute with the monotone sigmoid, and the per-channel
    #  bias is constant within each pooling window -> identical to PyTorch's
    #  conv-bias -> sigmoid -> maxpool ordering.)
    m = jnp.maximum(jnp.maximum(z[:, 0:128], z[:, 128:256]),
                    jnp.maximum(z[:, 256:384], z[:, 384:512]))
    pooled = _sigmoid(m + bconv_ref[...])                       # (1, 128)

    # fc2 (zero-padded to 128 output lanes): (1, 128) @ (128, 128) -> (1, 128)
    out = jnp.dot(pooled, w2_ref[...],
                  preferred_element_type=jnp.float32) + b2_ref[...]

    # Lane-dense, unmasked (8, 128) store; real result lives in row 0, lanes 0:2.
    o_ref[...] = jnp.broadcast_to(out, o_ref.shape)


def v_fc_forward(x, packed):
    # Homogeneous-coordinate input row: [x0, x1, 1, 0, 0, 0, 0, 0]  (1, 8)
    xa = jnp.zeros((1, 8), jnp.float32)
    xa = xa.at[0, :2].set(x.reshape(2).astype(jnp.float32))
    xa = xa.at[0, 2].set(1.0)

    out = pl.pallas_call(
        _vfc_kernel,
        out_shape=jax.ShapeDtypeStruct((8, 128), jnp.float32),
        in_specs=[
            pl.BlockSpec((1, 8), lambda: (0, 0)),      # x (augmented)
            pl.BlockSpec((8, 64), lambda: (0, 0)),     # fc1 weight+bias
            pl.BlockSpec((64, 512), lambda: (0, 0)),   # conv+pool Toeplitz
            pl.BlockSpec((1, 128), lambda: (0, 0)),    # conv bias (pool layout)
            pl.BlockSpec((128, 128), lambda: (0, 0)),  # fc2 weight (padded)
            pl.BlockSpec((1, 128), lambda: (0, 0)),    # fc2 bias (padded)
        ],
        out_specs=pl.BlockSpec((8, 128), lambda: (0, 0)),
    )(xa, packed["w1b"], packed["mcat"], packed["bconv"],
      packed["w2"], packed["b2"])
    return out[0, :2]


v_fc_forward_jit = jax.jit(v_fc_forward)


# ----------------------------------------------------------------------------
# One-time parameter packing (all layout work hoisted out of the forward pass)
# ----------------------------------------------------------------------------
def _pool_columns():
    """Column layout of the fused conv+pool matmul:
    col = corner*128 + c*16 + i2*4 + j2  ->  (spatial index p, channel c)."""
    corners = [(0, 0), (0, 1), (1, 0), (1, 1)]
    p_of_col = np.zeros((512,), np.int64)
    c_of_col = np.zeros((512,), np.int64)
    for corner, (di, dj) in enumerate(corners):
        for c in range(8):
            for i2 in range(4):
                for j2 in range(4):
                    col = corner * 128 + c * 16 + i2 * 4 + j2
                    p_of_col[col] = (2 * i2 + di) * 8 + (2 * j2 + dj)
                    c_of_col[col] = c
    return p_of_col, c_of_col


def pack_params(p):
    """Fold transposes, bias rows, im2col structure, pool-corner selection and
    lane padding into the weights once (numpy, exact f32)."""
    fc1_w = np.asarray(p["fc1_w"], np.float32)                    # (64, 2)
    fc1_b = np.asarray(p["fc1_b"], np.float32)                    # (64,)
    conv_w = np.asarray(p["conv1_w"], np.float32).reshape(8, 9)   # (8, 9)
    conv_b = np.asarray(p["conv1_b"], np.float32)                 # (8,)
    fc2_w = np.asarray(p["fc2_w"], np.float32)                    # (2, 128)
    fc2_b = np.asarray(p["fc2_b"], np.float32)                    # (2,)

    # fc1 weight + bias as one (8, 64) matrix (rows 0-1: W^T, row 2: bias).
    w1b = np.zeros((8, 64), np.float32)
    w1b[:2] = fc1_w.T
    w1b[2] = fc1_b

    # im2col structure of a zero-padded 8x8 grid:
    # E[m, p, k] = 1 iff output position p, tap k (3x3, pad=1) reads pixel m.
    E = np.zeros((64, 64, 9), np.float32)
    for i in range(8):
        for j in range(8):
            pp = i * 8 + j
            for dh in range(3):
                for dw in range(3):
                    si, sj = i + dh - 1, j + dw - 1
                    if 0 <= si < 8 and 0 <= sj < 8:
                        E[si * 8 + sj, pp, dh * 3 + dw] = 1.0

    p_of_col, c_of_col = _pool_columns()
    G = E[:, p_of_col, :]                                  # (64, 512, 9)
    mcat = np.einsum("mok,ok->mo", G, conv_w[c_of_col])    # (64, 512)
    bconv = conv_b[c_of_col[:128]].reshape(1, 128)         # bias per pooled col

    w2 = np.zeros((128, 128), np.float32)
    w2[:, :2] = fc2_w.T
    b2 = np.zeros((1, 128), np.float32)
    b2[0, :2] = fc2_b

    return {
        "w1b": jnp.asarray(w1b),                           # (8, 64)
        "mcat": jnp.asarray(mcat),                         # (64, 512)
        "bconv": jnp.asarray(bconv),                       # (1, 128)
        "w2": jnp.asarray(w2),                             # (128, 128)
        "b2": jnp.asarray(b2),                             # (1, 128)
    }


# ----------------------------------------------------------------------------
# Parameters (deterministic synthetic init, PyTorch layouts) and reference
# ----------------------------------------------------------------------------
def init_params(seed=0):
    key = jax.random.PRNGKey(seed)
    k = jax.random.split(key, 6)
    s = 0.1
    return {
        "fc1_w": s * jax.random.normal(k[0], (64, 2), jnp.float32),
        "fc1_b": s * jax.random.normal(k[1], (64,), jnp.float32),
        "conv1_w": s * jax.random.normal(k[2], (8, 1, 3, 3), jnp.float32),
        "conv1_b": s * jax.random.normal(k[3], (8,), jnp.float32),
        "fc2_w": s * jax.random.normal(k[4], (2, 128), jnp.float32),
        "fc2_b": s * jax.random.normal(k[5], (2,), jnp.float32),
    }


def reference_forward(x, p):
    """Plain numpy (f64) reference with PyTorch semantics."""
    sig = lambda v: 1.0 / (1.0 + np.exp(-v))
    xn = np.asarray(x, np.float64)
    w1 = np.asarray(p["fc1_w"], np.float64)
    b1 = np.asarray(p["fc1_b"], np.float64)
    wc = np.asarray(p["conv1_w"], np.float64)
    bc = np.asarray(p["conv1_b"], np.float64)
    w2 = np.asarray(p["fc2_w"], np.float64)
    b2 = np.asarray(p["fc2_b"], np.float64)

    h = sig(w1 @ xn + b1)                                  # fc1 + sigmoid
    img = np.pad(h.reshape(8, 8), 1)                       # view(1,8,8) + pad
    z = np.zeros((8, 8, 8))
    for c in range(8):
        for i in range(8):
            for j in range(8):
                z[c, i, j] = np.sum(wc[c, 0] * img[i:i + 3, j:j + 3]) + bc[c]
    z = sig(z)                                             # conv + sigmoid
    pooled = z.reshape(8, 4, 2, 4, 2).max(axis=(2, 4))     # maxpool 2x2
    return w2 @ pooled.reshape(-1) + b2                    # flatten + fc2


if __name__ == "__main__":
    params = init_params(seed=0)
    packed = pack_params(params)

    # forward implies a single dim=2 input vector (view(1, 8, 8) needs batch 1)
    x = jax.random.normal(jax.random.PRNGKey(0), (2,), dtype=jnp.float32)

    out = v_fc_forward_jit(x, packed)
    out = jax.block_until_ready(out)
    assert out.shape == (2,) and out.dtype == jnp.float32

    ref = reference_forward(np.asarray(x), params)
    np.testing.assert_allclose(np.asarray(out, np.float64), ref,
                               rtol=2e-2, atol=2e-2)
    print("KERNEL_OK")
</pallas_src>

<mosaic_0001>
module attributes {stable_mosaic.version = 11 : i64} {
  func.func @_vfc_kernel(%arg0: memref<1x8xf32, #tpu.memory_space<vmem>>, %arg1: memref<8x64xf32, #tpu.memory_space<vmem>>, %arg2: memref<64x512xf32, #tpu.memory_space<vmem>>, %arg3: memref<1x128xf32, #tpu.memory_space<vmem>>, %arg4: memref<128x128xf32, #tpu.memory_space<vmem>>, %arg5: memref<1x128xf32, #tpu.memory_space<vmem>>, %arg6: memref<8x128xf32, #tpu.memory_space<vmem>>) attributes {dimension_semantics = [], scalar_prefetch = 0 : i64, scratch_operands = 0 : i64, tpu.core_type = #tpu.core_type<tc>} {
    %c0 = arith.constant 0 : index
    %c0_0 = arith.constant 0 : index
    %0 = vector.load %arg0[%c0, %c0_0] : memref<1x8xf32, #tpu.memory_space<vmem>>, vector<1x8xf32>
    %c0_1 = arith.constant 0 : index
    %c0_2 = arith.constant 0 : index
    %1 = vector.load %arg1[%c0_1, %c0_2] : memref<8x64xf32, #tpu.memory_space<vmem>>, vector<8x64xf32>
    %cst = arith.constant dense<0.000000e+00> : vector<1x64xf32>
    %2 = tpu.matmul %0, %1, %cst {dimension_numbers = #tpu.dot_dimension_numbers<[1], [0], [0], [1], [0, 0, 1, 1], [], []>} : vector<1x8xf32>, vector<8x64xf32>, vector<1x64xf32> -> vector<1x64xf32>
    %cst_3 = arith.constant 0.000000e+00 : f32
    %3 = vector.broadcast %cst_3 : f32 to vector<1x64xf32>
    %4 = arith.subf %3, %2 : vector<1x64xf32>
    %5 = math.exp %4 : vector<1x64xf32>
    %cst_4 = arith.constant 1.000000e+00 : f32
    %6 = vector.broadcast %cst_4 : f32 to vector<1x64xf32>
    %7 = arith.addf %6, %5 : vector<1x64xf32>
    %cst_5 = arith.constant 1.000000e+00 : f32
    %8 = vector.broadcast %cst_5 : f32 to vector<1x64xf32>
    %9 = arith.divf %8, %7 : vector<1x64xf32>
    %c0_6 = arith.constant 0 : index
    %c0_7 = arith.constant 0 : index
    %10 = vector.load %arg2[%c0_6, %c0_7] : memref<64x512xf32, #tpu.memory_space<vmem>>, vector<64x512xf32>
    %cst_8 = arith.constant dense<0.000000e+00> : vector<1x512xf32>
    %11 = tpu.matmul %9, %10, %cst_8 {dimension_numbers = #tpu.dot_dimension_numbers<[1], [0], [0], [1], [0, 0, 1, 1], [], []>} : vector<1x64xf32>, vector<64x512xf32>, vector<1x512xf32> -> vector<1x512xf32>
    %12 = vector.extract_strided_slice %11 {offsets = [0, 0], sizes = [1, 128], strides = [1, 1]} : vector<1x512xf32> to vector<1x128xf32>
    %13 = vector.extract_strided_slice %11 {offsets = [0, 128], sizes = [1, 128], strides = [1, 1]} : vector<1x512xf32> to vector<1x128xf32>
    %14 = arith.maximumf %12, %13 : vector<1x128xf32>
    %15 = vector.extract_strided_slice %11 {offsets = [0, 256], sizes = [1, 128], strides = [1, 1]} : vector<1x512xf32> to vector<1x128xf32>
    %16 = vector.extract_strided_slice %11 {offsets = [0, 384], sizes = [1, 128], strides = [1, 1]} : vector<1x512xf32> to vector<1x128xf32>
    %17 = arith.maximumf %15, %16 : vector<1x128xf32>
    %18 = arith.maximumf %14, %17 : vector<1x128xf32>
    %c0_9 = arith.constant 0 : index
    %c0_10 = arith.constant 0 : index
    %19 = vector.load %arg3[%c0_9, %c0_10] : memref<1x128xf32, #tpu.memory_space<vmem>>, vector<1x128xf32>
    %20 = arith.addf %18, %19 : vector<1x128xf32>
    %cst_11 = arith.constant 0.000000e+00 : f32
    %21 = vector.broadcast %cst_11 : f32 to vector<1x128xf32>
    %22 = arith.subf %21, %20 : vector<1x128xf32>
    %23 = math.exp %22 : vector<1x128xf32>
    %cst_12 = arith.constant 1.000000e+00 : f32
    %24 = vector.broadcast %cst_12 : f32 to vector<1x128xf32>
    %25 = arith.addf %24, %23 : vector<1x128xf32>
    %cst_13 = arith.constant 1.000000e+00 : f32
    %26 = vector.broadcast %cst_13 : f32 to vector<1x128xf32>
    %27 = arith.divf %26, %25 : vector<1x128xf32>
    %c0_14 = arith.constant 0 : index
    %c0_15 = arith.constant 0 : index
    %28 = vector.load %arg4[%c0_14, %c0_15] : memref<128x128xf32, #tpu.memory_space<vmem>>, vector<128x128xf32>
    %cst_16 = arith.constant dense<0.000000e+00> : vector<1x128xf32>
    %29 = tpu.matmul %27, %28, %cst_16 {dimension_numbers = #tpu.dot_dimension_numbers<[1], [0], [0], [1], [0, 0, 1, 1], [], []>} : vector<1x128xf32>, vector<128x128xf32>, vector<1x128xf32> -> vector<1x128xf32>
    %c0_17 = arith.constant 0 : index
    %c0_18 = arith.constant 0 : index
    %30 = vector.load %arg5[%c0_17, %c0_18] : memref<1x128xf32, #tpu.memory_space<vmem>>, vector<1x128xf32>
    %31 = arith.addf %29, %30 : vector<1x128xf32>
    %32 = vector.shape_cast %31 : vector<1x128xf32> to vector<1x128xf32>
    %33 = vector.broadcast %32 : vector<1x128xf32> to vector<8x128xf32>
    %c0_19 = arith.constant 0 : index
    %c0_20 = arith.constant 0 : index
    %34 = vector.load %arg6[%c0_19, %c0_20] : memref<8x128xf32, #tpu.memory_space<vmem>>, vector<8x128xf32>
    tpu.vector_store %arg6[%c0_19, %c0_20], %33 {strides = array<i32>} : memref<8x128xf32, #tpu.memory_space<vmem>>, vector<8x128xf32>,
    return
  }
}

</mosaic_0001>

<llo_original>
// kernel: v_fc_forward.1
$region0: #{v_fc_forward.1}
  #allocation0 [shape = 'u32[]', space=smem, size = 0x4, offset = 0x4, fixed_abs, tag = 'smem constant byte address 0x4 - core index']
  #allocation1 [shape = 'u32[144,128]{1,0:T(1,128)}', space=vmem, size = 0x12000, scoped, tag = 'internal scratch']
  %s0 = inlined_call_operand.vmem [shape: f32[1,8], index: 0, kind: input, shape index: {}]
  %s1 = inlined_call_operand.vmem [shape: f32[8,64], index: 1, kind: input, shape index: {}]
  %s2 = inlined_call_operand.hbm [shape: f32[64,512], index: 2, kind: input, shape index: {}]
  %s3 = inlined_call_operand.vmem [shape: f32[1,128], index: 3, kind: input, shape index: {}]
  %s4 = inlined_call_operand.hbm [shape: f32[128,128], index: 4, kind: input, shape index: {}]
  %s5 = inlined_call_operand.vmem [shape: f32[1,128], index: 5, kind: input, shape index: {}]
  %s6 = inlined_call_operand.vmem [shape: f32[8,128], index: 6, kind: output, shape index: {}]
  %s7 = sld [smem:[#allocation0]]
  $region42: #{v_fc_forward.1} parent=0
    _
  %s9 = ssub.s32 1, %s7
  %s10 = scalar_select 0, %s9, %s7
  $region1: #{v_fc_forward.1} parent=0
    #allocation2 [shape = 'u8[131072]{0}', space=vmem, size = 0x20000, scoped, tag = 'input window, operand 2, single buffered']
    #allocation3 [shape = 's32[1]{0}', space=sflag, size = 0x4, scoped, tag = 'scoped memory for v_fc_forward.1']
    #allocation4 [shape = 'u8[65536]{0}', space=vmem, size = 0x10000, scoped, tag = 'input window, operand 4, single buffered']
    #allocation5 [shape = 's32[1]{0}', space=sflag, size = 0x4, scoped, tag = 'scoped memory for v_fc_forward.1']
    %11 = vsyncpa [#allocation3], 0
    %12 = vsyncpa [#allocation5], 0
    // Predicated region
    $region2: #{v_fc_forward.1} parent=1 // pred_check
      _
    $region3: #{v_fc_forward.1} parent=1 // pred_check_branch
      %14 = sbr.rel (0) target = $region5
    $region4: #{v_fc_forward.1} parent=1 // pred_region
      _
    $region5: #{v_fc_forward.1} parent=1 // pred_fallthru
      _
    // Predicated region
    $region6: #{v_fc_forward.1} parent=1 // pred_check
      _
    $region7: #{v_fc_forward.1} parent=1 // pred_check_branch
      %16 = sbr.rel (0) target = $region9
    $region8: #{v_fc_forward.1} parent=1 // pred_region
      _
    $region9: #{v_fc_forward.1} parent=1 // pred_fallthru
      _
    // Predicated region
    $region10: #{v_fc_forward.1} parent=1 // pred_check
      _
    $region11: #{v_fc_forward.1} parent=1 // pred_check_branch
      %18 = sbr.rel (0) target = $region13
    $region12: #{v_fc_forward.1} parent=1 // pred_region
      %s20 = ssub.s32 4096, 4096
      %21 = vsyncadd [#allocation3], %s20
      %s22 = sshll.u32 [#allocation2], 4
      %s23 = int_to_ptr.vmem [resolvable:$true] %s22
      %28 = dma.hbm_to_vmem [thread:$0]  %s2, 4096, %s23, [#allocation3], 512, 512, 32
    $region13: #{v_fc_forward.1} parent=1 // pred_fallthru
      _
    // Predicated region
    $region14: #{v_fc_forward.1} parent=1 // pred_check
      _
    $region15: #{v_fc_forward.1} parent=1 // pred_check_branch
      %30 = sbr.rel (0) target = $region17
    $region16: #{v_fc_forward.1} parent=1 // pred_region
      _
    $region17: #{v_fc_forward.1} parent=1 // pred_fallthru
      _
    // Predicated region
    $region18: #{v_fc_forward.1} parent=1 // pred_check
      _
    $region19: #{v_fc_forward.1} parent=1 // pred_check_branch
      %32 = sbr.rel (0) target = $region21
    $region20: #{v_fc_forward.1} parent=1 // pred_region
      %s34 = ssub.s32 2048, 2048
      %35 = vsyncadd [#allocation5], %s34
      %s36 = sshll.u32 [#allocation4], 4
      %s37 = int_to_ptr.vmem [resolvable:$true] %s36
      %42 = dma.hbm_to_vmem [thread:$0]  %s4, 2048, %s37, [#allocation5], 128, 128, 8
    $region21: #{v_fc_forward.1} parent=1 // pred_fallthru
      _
    // Predicated region
    $region22: #{v_fc_forward.1} parent=1 // pred_check
      _
    $region23: #{v_fc_forward.1} parent=1 // pred_check_branch
      %44 = sbr.rel (0) target = $region25
    $region24: #{v_fc_forward.1} parent=1 // pred_region
      _
    $region25: #{v_fc_forward.1} parent=1 // pred_fallthru
      _
    // Predicated region
    $region26: #{v_fc_forward.1} parent=1 // pred_check
      _
    $region27: #{v_fc_forward.1} parent=1 // pred_check_branch
      %46 = sbr.rel (0) target = $region29
    $region28: #{v_fc_forward.1} parent=1 // pred_region
      %47 = dma.done [#allocation3], 4096
    $region29: #{v_fc_forward.1} parent=1 // pred_fallthru
      _
    // Predicated region
    $region30: #{v_fc_forward.1} parent=1 // pred_check
      _
    $region31: #{v_fc_forward.1} parent=1 // pred_check_branch
      %49 = sbr.rel (0) target = $region33
    $region32: #{v_fc_forward.1} parent=1 // pred_region
      %50 = dma.done [#allocation5], 2048
    $region33: #{v_fc_forward.1} parent=1 // pred_fallthru
      _
    %v51 = vld [vmem:[%s0] sm:$0x1]
    %v52 = vld [vmem:[%s1] sm:$0xff]
    %vm53 = vcmask 64512
    %v55 = vsel %vm53, %v51, 0
    %57 = vmatprep.subr.mxu0 0.0
    %58 = vmatpush1.msra.mxu0 %v52
    %59 = vmatprep.subr.mxu0 0.0
    %60 = vmatpush1.msra.mxu0 0.0
    %61 = vmatprep.subr.mxu0 0.0
    %62 = vmatpush1.msra.mxu0 0.0
    %63 = vmatprep.subr.mxu0 0.0
    %64 = vmatpush1.msra.mxu0 0.0
    %65 = vmatprep.subr.mxu0 0.0
    %66 = vmatpush1.msra.mxu0 0.0
    %67 = vmatprep.subr.mxu0 0.0
    %68 = vmatpush1.msra.mxu0 0.0
    %69 = vmatprep.subr.mxu0 0.0
    %70 = vmatpush1.msra.mxu0 0.0
    %71 = vmatprep.subr.mxu0 0.0
    %72 = vmatpush1.msra.mxu0 0.0
    %73 = vmatprep.subr.mxu0 0.0
    %74 = vmatpush1.msra.mxu0 0.0
    %75 = vmatprep.subr.mxu0 0.0
    %76 = vmatpush1.msra.mxu0 0.0
    %77 = vmatprep.subr.mxu0 0.0
    %78 = vmatpush1.msra.mxu0 0.0
    %79 = vmatprep.subr.mxu0 0.0
    %80 = vmatpush1.msra.mxu0 0.0
    %81 = vmatprep.subr.mxu0 0.0
    %82 = vmatpush1.msra.mxu0 0.0
    %83 = vmatprep.subr.mxu0 0.0
    %84 = vmatpush1.msra.mxu0 0.0
    %85 = vmatprep.subr.mxu0 0.0
    %86 = vmatpush1.msra.mxu0 0.0
    %87 = vmatprep.subr.mxu0 0.0
    %88 = vmatpush1.msra.mxu0 0.0
    %89 = vmatprep.subr.mxu0 0.0
    %90 = vmatpush1.msra.mxu0 0.0
    %91 = vmatprep.subr.mxu0 0.0
    %92 = vmatpush1.msra.mxu0 0.0
    %93 = vmatprep.subr.mxu0 0.0
    %94 = vmatpush1.msra.mxu0 0.0
    %95 = vmatprep.subr.mxu0 0.0
    %96 = vmatpush1.msra.mxu0 0.0
    %97 = vmatprep.subr.mxu0 0.0
    %98 = vmatpush1.msra.mxu0 0.0
    %99 = vmatprep.subr.mxu0 0.0
    %100 = vmatpush1.msra.mxu0 0.0
    %101 = vmatprep.subr.mxu0 0.0
    %102 = vmatpush1.msra.mxu0 0.0
    %103 = vmatprep.subr.mxu0 0.0
    %104 = vmatpush1.msra.mxu0 0.0
    %105 = vmatprep.subr.mxu0 0.0
    %106 = vmatpush1.msra.mxu0 0.0
    %107 = vmatprep.subr.mxu0 0.0
    %108 = vmatpush1.msra.mxu0 0.0
    %109 = vmatprep.subr.mxu0 0.0
    %110 = vmatpush1.msra.mxu0 0.0
    %111 = vmatprep.subr.mxu0 0.0
    %112 = vmatpush1.msra.mxu0 0.0
    %113 = vmatprep.subr.mxu0 0.0
    %114 = vmatpush1.msra.mxu0 0.0
    %115 = vmatprep.subr.mxu0 0.0
    %116 = vmatpush1.msra.mxu0 0.0
    %117 = vmatprep.subr.mxu0 0.0
    %118 = vmatpush1.msra.mxu0 0.0
    %119 = vmatprep.subr.mxu0 0.0
    %120 = vmatpush1.msra.mxu0 0.0
    %121 = vmatprep.mubr.f32.mxu0 0.0
    %122 = vmatmul.mubr.f32.gmra.mrb[0].mxu0 %v55
    %v123 = vpop.f32.mrb[0].mxu0
    %v124 = vadd.f32 0.0, %v123
    %v125 = vpop.f32.mrb[0].mxu0
    %126 = vdwg.mxu0
    %v127 = vsub.f32 0.0, %v124
    %v128 = vmul.f32 %v127, 1.442695
    %v129 = vpow.pop %v128
    %v130 = vadd.f32 %v129, 1.0
    %v131 = vrcp.pop %v130
    %v132 = vmul.f32 1.0, %v131
    %v133 = vld [vmem:[#allocation2] sm:$0xff]
    %v134 = vld [vmem:[#allocation2 + $0x8] sm:$0xff]
    %v135 = vld [vmem:[#allocation2 + $0x10] sm:$0xff]
    %v136 = vld [vmem:[#allocation2 + $0x18] sm:$0xff]
    %v137 = vld [vmem:[#allocation2 + $0x20] sm:$0xff]
    %v138 = vld [vmem:[#allocation2 + $0x28] sm:$0xff]
    %v139 = vld [vmem:[#allocation2 + $0x30] sm:$0xff]
    %v140 = vld [vmem:[#allocation2 + $0x38] sm:$0xff]
    %v141 = vld [vmem:[#allocation2 + $0x40] sm:$0xff]
    %v142 = vld [vmem:[#allocation2 + $0x48] sm:$0xff]
    %v143 = vld [vmem:[#allocation2 + $0x50] sm:$0xff]
    %v144 = vld [vmem:[#allocation2 + $0x58] sm:$0xff]
    %v145 = vld [vmem:[#allocation2 + $0x60] sm:$0xff]
    %v146 = vld [vmem:[#allocation2 + $0x68] sm:$0xff]
    %v147 = vld [vmem:[#allocation2 + $0x70] sm:$0xff]
    %v148 = vld [vmem:[#allocation2 + $0x78] sm:$0xff]
    %v149 = vld [vmem:[#allocation2 + $0x80] sm:$0xff]
    %v150 = vld [vmem:[#allocation2 + $0x88] sm:$0xff]
    %v151 = vld [vmem:[#allocation2 + $0x90] sm:$0xff]
    %v152 = vld [vmem:[#allocation2 + $0x98] sm:$0xff]
    %v153 = vld [vmem:[#allocation2 + $0xa0] sm:$0xff]
    %v154 = vld [vmem:[#allocation2 + $0xa8] sm:$0xff]
    %v155 = vld [vmem:[#allocation2 + $0xb0] sm:$0xff]
    %v156 = vld [vmem:[#allocation2 + $0xb8] sm:$0xff]
    %v157 = vld [vmem:[#allocation2 + $0xc0] sm:$0xff]
    %v158 = vld [vmem:[#allocation2 + $0xc8] sm:$0xff]
    %v159 = vld [vmem:[#allocation2 + $0xd0] sm:$0xff]
    %v160 = vld [vmem:[#allocation2 + $0xd8] sm:$0xff]
    %v161 = vld [vmem:[#allocation2 + $0xe0] sm:$0xff]
    %v162 = vld [vmem:[#allocation2 + $0xe8] sm:$0xff]
    %v163 = vld [vmem:[#allocation2 + $0xf0] sm:$0xff]
    %v164 = vld [vmem:[#allocation2 + $0xf8] sm:$0xff]
    %vm165 = vcmask 523264
    %v167 = vsel %vm165, %v132, 0
    %169 = vmatprep.subr.mxu0 %v134
    %170 = vmatpush1.msra.mxu0 %v133
    %171 = vmatprep.subr.mxu0 %v138
    %172 = vmatpush1.msra.mxu0 %v137
    %173 = vmatprep.subr.mxu0 %v142
    %174 = vmatpush1.msra.mxu0 %v141
    %175 = vmatprep.subr.mxu0 %v146
    %176 = vmatpush1.msra.mxu0 %v145
    %177 = vmatprep.subr.mxu0 %v150
    %178 = vmatpush1.msra.mxu0 %v149
    %179 = vmatprep.subr.mxu0 %v154
    %180 = vmatpush1.msra.mxu0 %v153
    %181 = vmatprep.subr.mxu0 %v158
    %182 = vmatpush1.msra.mxu0 %v157
    %183 = vmatprep.subr.mxu0 %v162
    %184 = vmatpush1.msra.mxu0 %v161
    %185 = vmatprep.subr.mxu0 0.0
    %186 = vmatpush1.msra.mxu0 0.0
    %187 = vmatprep.subr.mxu0 0.0
    %188 = vmatpush1.msra.mxu0 0.0
    %189 = vmatprep.subr.mxu0 0.0
    %190 = vmatpush1.msra.mxu0 0.0
    %191 = vmatprep.subr.mxu0 0.0
    %192 = vmatpush1.msra.mxu0 0.0
    %193 = vmatprep.subr.mxu0 0.0
    %194 = vmatpush1.msra.mxu0 0.0
    %195 = vmatprep.subr.mxu0 0.0
    %196 = vmatpush1.msra.mxu0 0.0
    %197 = vmatprep.subr.mxu0 0.0
    %198 = vmatpush1.msra.mxu0 0.0
    %199 = vmatprep.subr.mxu0 0.0
    %200 = vmatpush1.msra.mxu0 0.0
    %201 = vmatprep.subr.mxu0 0.0
    %202 = vmatpush1.msra.mxu0 0.0
    %203 = vmatprep.subr.mxu0 0.0
    %204 = vmatpush1.msra.mxu0 0.0
    %205 = vmatprep.subr.mxu0 0.0
    %206 = vmatpush1.msra.mxu0 0.0
    %207 = vmatprep.subr.mxu0 0.0
    %208 = vmatpush1.msra.mxu0 0.0
    %209 = vmatprep.subr.mxu0 0.0
    %210 = vmatpush1.msra.mxu0 0.0
    %211 = vmatprep.subr.mxu0 0.0
    %212 = vmatpush1.msra.mxu0 0.0
    %213 = vmatprep.subr.mxu0 0.0
    %214 = vmatpush1.msra.mxu0 0.0
    %215 = vmatprep.subr.mxu0 0.0
    %216 = vmatpush1.msra.mxu0 0.0
    %217 = vmatprep.subr.mxu0 0.0
    %218 = vmatpush1.msra.mxu0 0.0
    %219 = vmatprep.subr.mxu0 0.0
    %220 = vmatpush1.msra.mxu0 0.0
    %221 = vmatprep.subr.mxu0 0.0
    %222 = vmatpush1.msra.mxu0 0.0
    %223 = vmatprep.subr.mxu0 0.0
    %224 = vmatpush1.msra.mxu0 0.0
    %225 = vmatprep.subr.mxu0 0.0
    %226 = vmatpush1.msra.mxu0 0.0
    %227 = vmatprep.subr.mxu0 0.0
    %228 = vmatpush1.msra.mxu0 0.0
    %229 = vmatprep.subr.mxu0 0.0
    %230 = vmatpush1.msra.mxu0 0.0
    %231 = vmatprep.subr.mxu0 0.0
    %232 = vmatpush1.msra.mxu0 0.0
    %233 = vmatprep.mubr.f32.mxu0 0.0
    %234 = vmatmul.mubr.f32.gmra.mrb[0].mxu0 %v167
    %v235 = vpop.f32.mrb[0].mxu0
    %v236 = vadd.f32 0.0, %v235
    %v237 = vpop.f32.mrb[0].mxu0
    %v238 = vadd.f32 0.0, %v237
    %239 = vdwg.mxu0
    %240 = vmatprep.subr.mxu0 %v136
    %241 = vmatpush1.msra.mxu0 %v135
    %242 = vmatprep.subr.mxu0 %v140
    %243 = vmatpush1.msra.mxu0 %v139
    %244 = vmatprep.subr.mxu0 %v144
    %245 = vmatpush1.msra.mxu0 %v143
    %246 = vmatprep.subr.mxu0 %v148
    %247 = vmatpush1.msra.mxu0 %v147
    %248 = vmatprep.subr.mxu0 %v152
    %249 = vmatpush1.msra.mxu0 %v151
    %250 = vmatprep.subr.mxu0 %v156
    %251 = vmatpush1.msra.mxu0 %v155
    %252 = vmatprep.subr.mxu0 %v160
    %253 = vmatpush1.msra.mxu0 %v159
    %254 = vmatprep.subr.mxu0 %v164
    %255 = vmatpush1.msra.mxu0 %v163
    %256 = vmatprep.subr.mxu0 0.0
    %257 = vmatpush1.msra.mxu0 0.0
    %258 = vmatprep.subr.mxu0 0.0
    %259 = vmatpush1.msra.mxu0 0.0
    %260 = vmatprep.subr.mxu0 0.0
    %261 = vmatpush1.msra.mxu0 0.0
    %262 = vmatprep.subr.mxu0 0.0
    %263 = vmatpush1.msra.mxu0 0.0
    %264 = vmatprep.subr.mxu0 0.0
    %265 = vmatpush1.msra.mxu0 0.0
    %266 = vmatprep.subr.mxu0 0.0
    %267 = vmatpush1.msra.mxu0 0.0
    %268 = vmatprep.subr.mxu0 0.0
    %269 = vmatpush1.msra.mxu0 0.0
    %270 = vmatprep.subr.mxu0 0.0
    %271 = vmatpush1.msra.mxu0 0.0
    %272 = vmatprep.subr.mxu0 0.0
    %273 = vmatpush1.msra.mxu0 0.0
    %274 = vmatprep.subr.mxu0 0.0
    %275 = vmatpush1.msra.mxu0 0.0
    %276 = vmatprep.subr.mxu0 0.0
    %277 = vmatpush1.msra.mxu0 0.0
    %278 = vmatprep.subr.mxu0 0.0
    %279 = vmatpush1.msra.mxu0 0.0
    %280 = vmatprep.subr.mxu0 0.0
    %281 = vmatpush1.msra.mxu0 0.0
    %282 = vmatprep.subr.mxu0 0.0
    %283 = vmatpush1.msra.mxu0 0.0
    %284 = vmatprep.subr.mxu0 0.0
    %285 = vmatpush1.msra.mxu0 0.0
    %286 = vmatprep.subr.mxu0 0.0
    %287 = vmatpush1.msra.mxu0 0.0
    %288 = vmatprep.subr.mxu0 0.0
    %289 = vmatpush1.msra.mxu0 0.0
    %290 = vmatprep.subr.mxu0 0.0
    %291 = vmatpush1.msra.mxu0 0.0
    %292 = vmatprep.subr.mxu0 0.0
    %293 = vmatpush1.msra.mxu0 0.0
    %294 = vmatprep.subr.mxu0 0.0
    %295 = vmatpush1.msra.mxu0 0.0
    %296 = vmatprep.subr.mxu0 0.0
    %297 = vmatpush1.msra.mxu0 0.0
    %298 = vmatprep.subr.mxu0 0.0
    %299 = vmatpush1.msra.mxu0 0.0
    %300 = vmatprep.subr.mxu0 0.0
    %301 = vmatpush1.msra.mxu0 0.0
    %302 = vmatprep.subr.mxu0 0.0
    %303 = vmatpush1.msra.mxu0 0.0
    %304 = vmatprep.mubr.f32.mxu0 0.0
    %305 = vmatmul.mubr.f32.gmra.mrb[0].mxu0 %v167
    %v306 = vpop.f32.mrb[0].mxu0
    %v307 = vadd.f32 0.0, %v306
    %v308 = vpop.f32.mrb[0].mxu0
    %v309 = vadd.f32 0.0, %v308
    %310 = vdwg.mxu0
    %v311 = vmax.f32 %v236, %v238
    %v312 = vmax.f32 %v307, %v309
    %v313 = vmax.f32 %v311, %v312
    %v314 = vld [vmem:[%s3] sm:$0x1]
    %v315 = vadd.f32 %v313, %v314
    %v316 = vsub.f32 0.0, %v315
    %v317 = vmul.f32 %v316, 1.442695
    %v318 = vpow.pop %v317
    %v319 = vadd.f32 %v318, 1.0
    %v320 = vrcp.pop %v319
    %v321 = vmul.f32 1.0, %v320
    %v322 = vld [vmem:[#allocation4] sm:$0xff]
    %v323 = vld [vmem:[#allocation4 + $0x8] sm:$0xff]
    %v324 = vld [vmem:[#allocation4 + $0x10] sm:$0xff]
    %v325 = vld [vmem:[#allocation4 + $0x18] sm:$0xff]
    %v326 = vld [vmem:[#allocation4 + $0x20] sm:$0xff]
    %v327 = vld [vmem:[#allocation4 + $0x28] sm:$0xff]
    %v328 = vld [vmem:[#allocation4 + $0x30] sm:$0xff]
    %v329 = vld [vmem:[#allocation4 + $0x38] sm:$0xff]
    %v330 = vld [vmem:[#allocation4 + $0x40] sm:$0xff]
    %v331 = vld [vmem:[#allocation4 + $0x48] sm:$0xff]
    %v332 = vld [vmem:[#allocation4 + $0x50] sm:$0xff]
    %v333 = vld [vmem:[#allocation4 + $0x58] sm:$0xff]
    %v334 = vld [vmem:[#allocation4 + $0x60] sm:$0xff]
    %v335 = vld [vmem:[#allocation4 + $0x68] sm:$0xff]
    %v336 = vld [vmem:[#allocation4 + $0x70] sm:$0xff]
    %v337 = vld [vmem:[#allocation4 + $0x78] sm:$0xff]
    %v338 = vld [vmem:[%s5] sm:$0x1]
    %339 = vmatprep.subr.mxu0 0.0
    %340 = vmatpush1.msra.mxu0 %v322
    %341 = vmatprep.subr.mxu0 0.0
    %342 = vmatpush1.msra.mxu0 %v323
    %343 = vmatprep.subr.mxu0 0.0
    %344 = vmatpush1.msra.mxu0 %v324
    %345 = vmatprep.subr.mxu0 0.0
    %346 = vmatpush1.msra.mxu0 %v325
    %347 = vmatprep.subr.mxu0 0.0
    %348 = vmatpush1.msra.mxu0 %v326
    %349 = vmatprep.subr.mxu0 0.0
    %350 = vmatpush1.msra.mxu0 %v327
    %351 = vmatprep.subr.mxu0 0.0
    %352 = vmatpush1.msra.mxu0 %v328
    %353 = vmatprep.subr.mxu0 0.0
    %354 = vmatpush1.msra.mxu0 %v329
    %355 = vmatprep.subr.mxu0 0.0
    %356 = vmatpush1.msra.mxu0 %v330
    %357 = vmatprep.subr.mxu0 0.0
    %358 = vmatpush1.msra.mxu0 %v331
    %359 = vmatprep.subr.mxu0 0.0
    %360 = vmatpush1.msra.mxu0 %v332
    %361 = vmatprep.subr.mxu0 0.0
    %362 = vmatpush1.msra.mxu0 %v333
    %363 = vmatprep.subr.mxu0 0.0
    %364 = vmatpush1.msra.mxu0 %v334
    %365 = vmatprep.subr.mxu0 0.0
    %366 = vmatpush1.msra.mxu0 %v335
    %367 = vmatprep.subr.mxu0 0.0
    %368 = vmatpush1.msra.mxu0 %v336
    %369 = vmatprep.subr.mxu0 0.0
    %370 = vmatpush1.msra.mxu0 %v337
    %371 = vmatprep.subr.mxu0 0.0
    %372 = vmatpush1.msra.mxu0 0.0
    %373 = vmatprep.subr.mxu0 0.0
    %374 = vmatpush1.msra.mxu0 0.0
    %375 = vmatprep.subr.mxu0 0.0
    %376 = vmatpush1.msra.mxu0 0.0
    %377 = vmatprep.subr.mxu0 0.0
    %378 = vmatpush1.msra.mxu0 0.0
    %379 = vmatprep.subr.mxu0 0.0
    %380 = vmatpush1.msra.mxu0 0.0
    %381 = vmatprep.subr.mxu0 0.0
    %382 = vmatpush1.msra.mxu0 0.0
    %383 = vmatprep.subr.mxu0 0.0
    %384 = vmatpush1.msra.mxu0 0.0
    %385 = vmatprep.subr.mxu0 0.0
    %386 = vmatpush1.msra.mxu0 0.0
    %387 = vmatprep.subr.mxu0 0.0
    %388 = vmatpush1.msra.mxu0 0.0
    %389 = vmatprep.subr.mxu0 0.0
    %390 = vmatpush1.msra.mxu0 0.0
    %391 = vmatprep.subr.mxu0 0.0
    %392 = vmatpush1.msra.mxu0 0.0
    %393 = vmatprep.subr.mxu0 0.0
    %394 = vmatpush1.msra.mxu0 0.0
    %395 = vmatprep.subr.mxu0 0.0
    %396 = vmatpush1.msra.mxu0 0.0
    %397 = vmatprep.subr.mxu0 0.0
    %398 = vmatpush1.msra.mxu0 0.0
    %399 = vmatprep.subr.mxu0 0.0
    %400 = vmatpush1.msra.mxu0 0.0
    %401 = vmatprep.subr.mxu0 0.0
    %402 = vmatpush1.msra.mxu0 0.0
    %403 = vmatprep.mubr.f32.mxu0 0.0
    %404 = vmatmul.mubr.f32.gmra.mrb[0].mxu0 %v321
    %v405 = vpop.f32.mrb[0].mxu0
    %v406 = vadd.f32 %v338, %v405
    %v407 = vpop.f32.mrb[0].mxu0
    %408 = vdwg.mxu0
    %v409 = vlaneseq
    %v410 = vshrl.u32 %v409, 7
    %v411 = vsub.s32 0, %v410
    %v412 = vrot.slane %v406, %v411
    %413 = vst [vmem:[%s6] sm:$0xff] %v412
    // Predicated region
    $region34: #{v_fc_forward.1} parent=1 // pred_check
      _
    $region35: #{v_fc_forward.1} parent=1 // pred_check_branch
      %415 = sbr.rel (0) target = $region37
    $region36: #{v_fc_forward.1} parent=1 // pred_region
      _
    $region37: #{v_fc_forward.1} parent=1 // pred_fallthru
      _
    // Predicated region
    $region38: #{v_fc_forward.1} parent=1 // pred_check
      _
    $region39: #{v_fc_forward.1} parent=1 // pred_check_branch
      %417 = sbr.rel (0) target = $region41
    $region40: #{v_fc_forward.1} parent=1 // pred_region
      _
    $region41: #{v_fc_forward.1} parent=1 // pred_fallthru
      _
    %418 = vsyncpa [#allocation3], 1
    %419 = vsyncpa [#allocation5], 1

</llo_original>
